<compile_context>
chip_gen: v7x
topology: tpu7x:2x2x1
jax: 0.10.0
libtpu: 0.0.40
codegen_flags: <defaults>
</compile_context>

<pallas_src>
import functools

import jax
import jax.numpy as jnp
from jax.experimental import pallas as pl
from jax.experimental.pallas import tpu as pltpu

DENSITY = 985.0


def _round_up(x, m):
    return ((x + m - 1) // m) * m


def _device_kind():
    try:
        return jax.devices()[0].device_kind.lower()
    except Exception:
        return ""


def _mass_kernel(t_ref, o_ref, acc_ref, *, lane_chunks):
    """Streaming signed-volume reduction over the face axis.

    t_ref:   (9, B, tile_f) block; row 3*v + c = coordinate c of vertex v.
    o_ref:   (1, B, 1) per-split reduced signed volume (written on last step).
    acc_ref: (B, 128) lane-wide VMEM accumulator, persistent across grid steps.
    """
    t = pl.program_id(1)

    @pl.when(t == 0)
    def _init():
        acc_ref[...] = jnp.zeros_like(acc_ref)

    # Compute the determinant per 128-lane chunk and accumulate immediately:
    # no (B, tile_f) temporary, pure VPU adds/muls, small live-vreg footprint.
    part = None
    for k in range(lane_chunks):
        sl = slice(k * 128, (k + 1) * 128)
        x0 = t_ref[0, :, sl]; y0 = t_ref[1, :, sl]; z0 = t_ref[2, :, sl]
        x1 = t_ref[3, :, sl]; y1 = t_ref[4, :, sl]; z1 = t_ref[5, :, sl]
        x2 = t_ref[6, :, sl]; y2 = t_ref[7, :, sl]; z2 = t_ref[8, :, sl]
        vol = (z0 * (x1 * y2 - x2 * y1)
               + z1 * (x2 * y0 - x0 * y2)
               + z2 * (x0 * y1 - x1 * y0))            # [B, 128]
        part = vol if part is None else part + vol
    acc_ref[...] += part

    # Fold the epilogue: one cross-lane reduce per split, tiny output write.
    @pl.when(t == pl.num_programs(1) - 1)
    def _fin():
        o_ref[0] = jnp.sum(acc_ref[...], axis=-1, keepdims=True)   # (B, 1)


def measurements_loss(v_shaped, faces, head_top_bc, head_top_face_idx,
                      left_heel_bc, left_heel_face_idx,
                      *, tile_f=None, n_splits=None):
    """v_shaped: [B, V, 3] float, faces: [F, 3] int. Returns {'mass','height'}."""
    B, V, _ = v_shaped.shape
    F = faces.shape[0]
    v_shaped = v_shaped.astype(jnp.float32)
    faces = faces.astype(jnp.int32)

    # ---------------- height: O(B) math, plain JAX glue ----------------
    head_y3 = v_shaped[:, faces[head_top_face_idx], 1]          # [B, 3]
    heel_y3 = v_shaped[:, faces[left_heel_face_idx], 1]         # [B, 3]
    head_y = (head_y3[:, 0] * head_top_bc[0] + head_y3[:, 1] * head_top_bc[1]
              + head_y3[:, 2] * head_top_bc[2])
    heel_y = (heel_y3[:, 0] * left_heel_bc[0] + heel_y3[:, 1] * left_heel_bc[1]
              + heel_y3[:, 2] * left_heel_bc[2])
    height = jnp.abs(head_y - heel_y)                            # [B]

    # ---------------- mass: Pallas streaming reduction ----------------
    kind = _device_kind()
    is_v7 = "7" in kind
    is_v6 = "v6" in kind
    if tile_f is None:
        tile_f = 4096 if is_v6 else 2048
    if n_splits is None:
        n_splits = 2 if is_v7 else 1

    # Keep the double-buffered input window comfortably inside scoped VMEM
    # (16 MiB v5e default, 32 MiB v6e, 32-of-64 MiB v7x).
    buf_budget = (12 << 20) if is_v6 else ((8 << 20) if is_v7 else (6 << 20))
    cap = max(128, (buf_budget // (9 * B * 4)) // 128 * 128)
    tile_f = min(tile_f, cap)
    tile_f = max(128, min(_round_up(tile_f, 128), _round_up(F, 128)))

    n_tiles = pl.cdiv(F, tile_f)
    if n_splits > 1 and n_tiles < 4 * n_splits:
        n_splits = 1        # keep >=4 tiles per core so both pipelines prime
    tiles_per_split = pl.cdiv(n_tiles, n_splits)
    f_pad = n_splits * tiles_per_split * tile_f

    # Pad the tiny face-index list (NOT the gathered tensor): three identical
    # vertex indices form a degenerate triangle with exactly-zero signed volume.
    if f_pad != F:
        faces_pad = jnp.concatenate(
            [faces, jnp.zeros((f_pad - F, 3), jnp.int32)], axis=0)
    else:
        faces_pad = faces

    # Gather straight into the dense kernel layout T9[3*v + c, b, f]
    # (faces on lanes, batch on sublanes, no size-3 sublane axis).
    v_cbv = jnp.transpose(v_shaped, (2, 0, 1))                   # [3, B, V]
    T9 = jnp.concatenate(
        [jnp.take(v_cbv, faces_pad[:, v], axis=2) for v in range(3)],
        axis=0)                                                  # [9, B, f_pad]

    kernel = functools.partial(_mass_kernel, lane_chunks=tile_f // 128)
    partials = pl.pallas_call(
        kernel,
        out_shape=jax.ShapeDtypeStruct((n_splits, B, 1), jnp.float32),
        grid_spec=pltpu.PrefetchScalarGridSpec(
            num_scalar_prefetch=0,
            grid=(n_splits, tiles_per_split),
            in_specs=[
                pl.BlockSpec((9, B, tile_f),
                             lambda s, t: (0, 0, s * tiles_per_split + t)),
            ],
            out_specs=pl.BlockSpec((1, B, 1), lambda s, t: (s, 0, 0)),
            scratch_shapes=[pltpu.VMEM((B, 128), jnp.float32)],
        ),
        compiler_params=pltpu.CompilerParams(
            dimension_semantics=("parallel", "arbitrary"),
            allow_input_fusion=[True],
        ),
        cost_estimate=pl.CostEstimate(
            flops=21 * B * f_pad,
            transcendentals=0,
            bytes_accessed=9 * 4 * B * f_pad + 4 * n_splits * B),
    )(T9)

    signed_vol = jnp.sum(partials, axis=(0, 2))                  # [B]
    mass = jnp.abs(signed_vol) / 6.0 * DENSITY
    return {"mass": mass, "height": height}


if __name__ == "__main__":
    key = jax.random.PRNGKey(0)
    k1, k2 = jax.random.split(key)

    B, V, F = 2, 32, 40
    v_shaped = jax.random.normal(k1, (B, V, 3), dtype=jnp.float32)
    faces = jax.random.randint(k2, (F, 3), 0, V, dtype=jnp.int32)

    # Deterministic synthetic "measurements.yaml" data (no file I/O).
    head_top_bc = (0.2, 0.3, 0.5)
    head_top_face_idx = 0
    left_heel_bc = (0.6, 0.3, 0.1)
    left_heel_face_idx = 5

    out = measurements_loss(v_shaped, faces, head_top_bc, head_top_face_idx,
                            left_heel_bc, left_heel_face_idx)
    mass = jax.block_until_ready(out["mass"])
    height = jax.block_until_ready(out["height"])

    # Pure-JAX reference (mirrors the PyTorch forward exactly).
    tris = jnp.take(v_shaped, faces.reshape(-1), axis=1).reshape(B, F, 3, 3)
    x = tris[..., 0]; y = tris[..., 1]; z = tris[..., 2]
    vol = (-x[:, :, 2] * y[:, :, 1] * z[:, :, 0]
           + x[:, :, 1] * y[:, :, 2] * z[:, :, 0]
           + x[:, :, 2] * y[:, :, 0] * z[:, :, 1]
           - x[:, :, 0] * y[:, :, 2] * z[:, :, 1]
           - x[:, :, 1] * y[:, :, 0] * z[:, :, 2]
           + x[:, :, 0] * y[:, :, 1] * z[:, :, 2]).sum(axis=1)
    mass_ref = jnp.abs(vol) / 6.0 * DENSITY
    ht = tris[:, head_top_face_idx]
    hl = tris[:, left_heel_face_idx]
    head = (ht[:, 0] * head_top_bc[0] + ht[:, 1] * head_top_bc[1]
            + ht[:, 2] * head_top_bc[2])
    heel = (hl[:, 0] * left_heel_bc[0] + hl[:, 1] * left_heel_bc[1]
            + hl[:, 2] * left_heel_bc[2])
    height_ref = jnp.abs(head[:, 1] - heel[:, 1])

    assert jnp.allclose(mass, mass_ref, rtol=1e-4, atol=1e-4), (mass, mass_ref)
    assert jnp.allclose(height, height_ref, rtol=1e-5, atol=1e-5), (height, height_ref)
    print("KERNEL_OK")
</pallas_src>

<mosaic_0001>
module attributes {stable_mosaic.version = 11 : i64} {
  func.func @_mass_kernel(%arg0: i32, %arg1: i32, %arg2: memref<9x2x128xf32, #tpu.memory_space<vmem>>, %arg3: memref<1x2x1xf32, #tpu.memory_space<vmem>>, %arg4: memref<2x128xf32, #tpu.memory_space<vmem>>) attributes {dimension_semantics = [#tpu.dimension_semantics<parallel>, #tpu.dimension_semantics<arbitrary>], iteration_bounds = array<i64: 1, 1>, scalar_prefetch = 0 : i64, scratch_operands = 1 : i64, tpu.core_type = #tpu.core_type<tc>, window_params = [{transform_indices = @transform_0, window_bounds = array<i64: 9, 2, 128>}, {transform_indices = @transform_1, window_bounds = array<i64: 1, 2, 1>}]} {
    %c0_i32 = arith.constant 0 : i32
    %0 = arith.cmpi eq, %arg1, %c0_i32 : i32
    %1 = arith.extui %0 : i1 to i32
    %c0_i32_0 = arith.constant 0 : i32
    %2 = arith.cmpi ne, %1, %c0_i32_0 : i32
    scf.if %2 {
      %cst = arith.constant 0.000000e+00 : f32
      %41 = vector.broadcast %cst : f32 to vector<2x128xf32>
      %c0_25 = arith.constant 0 : index
      %c0_26 = arith.constant 0 : index
      %42 = vector.load %arg4[%c0_25, %c0_26] : memref<2x128xf32, #tpu.memory_space<vmem>>, vector<2x128xf32>
      tpu.vector_store %arg4[%c0_25, %c0_26], %41 {strides = array<i32>} : memref<2x128xf32, #tpu.memory_space<vmem>>, vector<2x128xf32>,
    } else {
    }
    %c0 = arith.constant 0 : index
    %c0_1 = arith.constant 0 : index
    %c0_2 = arith.constant 0 : index
    %3 = vector.load %arg2[%c0, %c0_1, %c0_2] : memref<9x2x128xf32, #tpu.memory_space<vmem>>, vector<1x2x128xf32>
    %4 = vector.shape_cast %3 : vector<1x2x128xf32> to vector<2x128xf32>
    %c1 = arith.constant 1 : index
    %c0_3 = arith.constant 0 : index
    %c0_4 = arith.constant 0 : index
    %5 = vector.load %arg2[%c1, %c0_3, %c0_4] : memref<9x2x128xf32, #tpu.memory_space<vmem>>, vector<1x2x128xf32>
    %6 = vector.shape_cast %5 : vector<1x2x128xf32> to vector<2x128xf32>
    %c2 = arith.constant 2 : index
    %c0_5 = arith.constant 0 : index
    %c0_6 = arith.constant 0 : index
    %7 = vector.load %arg2[%c2, %c0_5, %c0_6] : memref<9x2x128xf32, #tpu.memory_space<vmem>>, vector<1x2x128xf32>
    %8 = vector.shape_cast %7 : vector<1x2x128xf32> to vector<2x128xf32>
    %c3 = arith.constant 3 : index
    %c0_7 = arith.constant 0 : index
    %c0_8 = arith.constant 0 : index
    %9 = vector.load %arg2[%c3, %c0_7, %c0_8] : memref<9x2x128xf32, #tpu.memory_space<vmem>>, vector<1x2x128xf32>
    %10 = vector.shape_cast %9 : vector<1x2x128xf32> to vector<2x128xf32>
    %c4 = arith.constant 4 : index
    %c0_9 = arith.constant 0 : index
    %c0_10 = arith.constant 0 : index
    %11 = vector.load %arg2[%c4, %c0_9, %c0_10] : memref<9x2x128xf32, #tpu.memory_space<vmem>>, vector<1x2x128xf32>
    %12 = vector.shape_cast %11 : vector<1x2x128xf32> to vector<2x128xf32>
    %c5 = arith.constant 5 : index
    %c0_11 = arith.constant 0 : index
    %c0_12 = arith.constant 0 : index
    %13 = vector.load %arg2[%c5, %c0_11, %c0_12] : memref<9x2x128xf32, #tpu.memory_space<vmem>>, vector<1x2x128xf32>
    %14 = vector.shape_cast %13 : vector<1x2x128xf32> to vector<2x128xf32>
    %c6 = arith.constant 6 : index
    %c0_13 = arith.constant 0 : index
    %c0_14 = arith.constant 0 : index
    %15 = vector.load %arg2[%c6, %c0_13, %c0_14] : memref<9x2x128xf32, #tpu.memory_space<vmem>>, vector<1x2x128xf32>
    %16 = vector.shape_cast %15 : vector<1x2x128xf32> to vector<2x128xf32>
    %c7 = arith.constant 7 : index
    %c0_15 = arith.constant 0 : index
    %c0_16 = arith.constant 0 : index
    %17 = vector.load %arg2[%c7, %c0_15, %c0_16] : memref<9x2x128xf32, #tpu.memory_space<vmem>>, vector<1x2x128xf32>
    %18 = vector.shape_cast %17 : vector<1x2x128xf32> to vector<2x128xf32>
    %c8 = arith.constant 8 : index
    %c0_17 = arith.constant 0 : index
    %c0_18 = arith.constant 0 : index
    %19 = vector.load %arg2[%c8, %c0_17, %c0_18] : memref<9x2x128xf32, #tpu.memory_space<vmem>>, vector<1x2x128xf32>
    %20 = vector.shape_cast %19 : vector<1x2x128xf32> to vector<2x128xf32>
    %21 = arith.mulf %10, %18 : vector<2x128xf32>
    %22 = arith.mulf %16, %12 : vector<2x128xf32>
    %23 = arith.subf %21, %22 : vector<2x128xf32>
    %24 = arith.mulf %8, %23 : vector<2x128xf32>
    %25 = arith.mulf %16, %6 : vector<2x128xf32>
    %26 = arith.mulf %4, %18 : vector<2x128xf32>
    %27 = arith.subf %25, %26 : vector<2x128xf32>
    %28 = arith.mulf %14, %27 : vector<2x128xf32>
    %29 = arith.addf %24, %28 : vector<2x128xf32>
    %30 = arith.mulf %4, %12 : vector<2x128xf32>
    %31 = arith.mulf %10, %6 : vector<2x128xf32>
    %32 = arith.subf %30, %31 : vector<2x128xf32>
    %33 = arith.mulf %20, %32 : vector<2x128xf32>
    %34 = arith.addf %29, %33 : vector<2x128xf32>
    %c0_19 = arith.constant 0 : index
    %c0_20 = arith.constant 0 : index
    %35 = vector.load %arg4[%c0_19, %c0_20] : memref<2x128xf32, #tpu.memory_space<vmem>>, vector<2x128xf32>
    %36 = arith.addf %35, %34 : vector<2x128xf32>
    %c0_21 = arith.constant 0 : index
    %c0_22 = arith.constant 0 : index
    %37 = vector.load %arg4[%c0_21, %c0_22] : memref<2x128xf32, #tpu.memory_space<vmem>>, vector<2x128xf32>
    tpu.vector_store %arg4[%c0_21, %c0_22], %36 {strides = array<i32>} : memref<2x128xf32, #tpu.memory_space<vmem>>, vector<2x128xf32>,
    %c0_i32_23 = arith.constant 0 : i32
    %38 = arith.cmpi eq, %arg1, %c0_i32_23 : i32
    %39 = arith.extui %38 : i1 to i32
    %c0_i32_24 = arith.constant 0 : i32
    %40 = arith.cmpi ne, %39, %c0_i32_24 : i32
    scf.if %40 {
      %c0_25 = arith.constant 0 : index
      %c0_26 = arith.constant 0 : index
      %41 = vector.load %arg4[%c0_25, %c0_26] : memref<2x128xf32, #tpu.memory_space<vmem>>, vector<2x128xf32>
      %cst = arith.constant dense<0.000000e+00> : vector<2xf32>
      %42 = vector.multi_reduction <add>, %41, %cst [1] : vector<2x128xf32> to vector<2xf32>
      %43 = vector.shape_cast %42 : vector<2xf32> to vector<2x1xf32>
      %c0_27 = arith.constant 0 : index
      %c0_28 = arith.constant 0 : index
      %c0_29 = arith.constant 0 : index
      %44 = vector.load %arg3[%c0_27, %c0_28, %c0_29] : memref<1x2x1xf32, #tpu.memory_space<vmem>>, vector<1x2x1xf32>
      %45 = vector.shape_cast %44 : vector<1x2x1xf32> to vector<2x1xf32>
      %46 = vector.shape_cast %43 : vector<2x1xf32> to vector<1x2x1xf32>
      tpu.vector_store %arg3[%c0_27, %c0_28, %c0_29], %46 {strides = array<i32>} : memref<1x2x1xf32, #tpu.memory_space<vmem>>, vector<1x2x1xf32>,
    } else {
    }
    return
  }
  func.func @transform_0(%arg0: i32, %arg1: i32) -> (i32, i32, i32) {
    %c1_i32 = arith.constant 1 : i32
    %0 = arith.muli %arg0, %c1_i32 : i32
    %1 = arith.addi %0, %arg1 : i32
    %c0_i32 = arith.constant 0 : i32
    %c0_i32_0 = arith.constant 0 : i32
    %c0_i32_1 = arith.constant 0 : i32
    return %c0_i32, %c0_i32_0, %1 : i32, i32, i32
  }
  func.func @transform_1(%arg0: i32, %arg1: i32) -> (i32, i32, i32) {
    %c0_i32 = arith.constant 0 : i32
    %c0_i32_0 = arith.constant 0 : i32
    %c0_i32_1 = arith.constant 0 : i32
    return %arg0, %c0_i32, %c0_i32_0 : i32, i32, i32
  }
}

</mosaic_0001>

<llo_original>
// kernel: tpu_custom_call.1
$region0: #{tpu_custom_call.1}
  #allocation0 [shape = 'u32[]', space=smem, size = 0x4, offset = 0x4, fixed_abs, tag = 'smem constant byte address 0x4 - core index']
  #allocation1 [shape = 'u32[144,128]{1,0:T(1,128)}', space=vmem, size = 0x12000, scoped, tag = 'internal scratch']
  #allocation2 [shape = 'f32[2,128]{1,0:T(2,128)}', space=vmem, size = 0x400, scoped, tag = 'scratch operand']
  %s0 = inlined_call_operand.hbm [shape: f32[9,2,128], index: 0, kind: input, shape index: {}]
  %s1 = inlined_call_operand.vmem [shape: f32[1,2,1], index: 1, kind: output, shape index: {}]
  %s2 = sld [smem:[#allocation0]]
  $region26: #{tpu_custom_call.1} parent=0
    _
  %s4 = ssub.s32 1, %s2
  %s5 = scalar_select 0, %s4, %s2
  $region1: #{tpu_custom_call.1} parent=0
    #allocation3 [shape = 'u8[9216]{0}', space=vmem, size = 0x2400, scoped, tag = 'input window, operand 0, single buffered']
    #allocation4 [shape = 's32[1]{0}', space=sflag, size = 0x4, scoped, tag = 'scoped memory for tpu_custom_call.1']
    %6 = vsyncpa [#allocation4], 0
    // Predicated region
    $region2: #{tpu_custom_call.1} parent=1 // pred_check
      _
    $region3: #{tpu_custom_call.1} parent=1 // pred_check_branch
      %8 = sbr.rel (0) target = $region5
    $region4: #{tpu_custom_call.1} parent=1 // pred_region
      %s9 = sadd.s32 0, 0
      %s11 = ssub.s32 288, 288
      %12 = vsyncadd [#allocation4], %s11
      %s13 = smul.addr %s9, 32
      %s14 = scalar_lea.hbm %s0, %s13
      %s15 = sshll.u32 [#allocation3], 4
      %s16 = int_to_ptr.vmem [resolvable:$true] %s15
      %21 = dma.hbm_to_vmem [thread:$0]  %s14, 288, %s16, [#allocation4], 32, 32, 2
    $region5: #{tpu_custom_call.1} parent=1 // pred_fallthru
      _
    // Predicated region
    $region6: #{tpu_custom_call.1} parent=1 // pred_check
      _
    $region7: #{tpu_custom_call.1} parent=1 // pred_check_branch
      %23 = sbr.rel (0) target = $region9
    $region8: #{tpu_custom_call.1} parent=1 // pred_region
      %24 = dma.done [#allocation4], 288
    $region9: #{tpu_custom_call.1} parent=1 // pred_fallthru
      _
    %s25 = sadd.s32 0, 0
    %p26 = scmp.eq.s32.totalorder 0, 0
    // Predicated region
    $region10: #{tpu_custom_call.1} parent=1 // pred_check
      %p27 = pneg %p26
    $region11: #{tpu_custom_call.1} parent=1 // pred_check_branch
      %29 = sbr.rel (%p27) target = $region13
    $region12: #{tpu_custom_call.1} parent=1 // pred_region
      %30 = vst [vmem:[#allocation2] sm:$0x3] 0.0
    $region13: #{tpu_custom_call.1} parent=1 // pred_fallthru
      _
    %v31 = vld [vmem:[#allocation3] sm:$0x3]
    %s32 = scalar_lea.vmem [#allocation3], 2
    %v33 = vld [vmem:[%s32] sm:$0x3]
    %s34 = scalar_lea.vmem [#allocation3], 4
    %v35 = vld [vmem:[%s34] sm:$0x3]
    %s36 = scalar_lea.vmem [#allocation3], 6
    %v37 = vld [vmem:[%s36] sm:$0x3]
    %s38 = scalar_lea.vmem [#allocation3], 8
    %v39 = vld [vmem:[%s38] sm:$0x3]
    %s40 = scalar_lea.vmem [#allocation3], 10
    %v41 = vld [vmem:[%s40] sm:$0x3]
    %s42 = scalar_lea.vmem [#allocation3], 12
    %v43 = vld [vmem:[%s42] sm:$0x3]
    %s44 = scalar_lea.vmem [#allocation3], 14
    %v45 = vld [vmem:[%s44] sm:$0x3]
    %s46 = scalar_lea.vmem [#allocation3], 16
    %v47 = vld [vmem:[%s46] sm:$0x3]
    %v48 = vmul.f32 %v37, %v45
    %v49 = vmul.f32 %v43, %v39
    %v50 = vsub.f32 %v48, %v49
    %v51 = vmul.f32 %v35, %v50
    %v52 = vmul.f32 %v43, %v33
    %v53 = vmul.f32 %v31, %v45
    %v54 = vsub.f32 %v52, %v53
    %v55 = vmul.f32 %v41, %v54
    %v56 = vadd.f32 %v51, %v55
    %v57 = vmul.f32 %v31, %v39
    %v58 = vmul.f32 %v37, %v33
    %v59 = vsub.f32 %v57, %v58
    %v60 = vmul.f32 %v47, %v59
    %v61 = vadd.f32 %v56, %v60
    %v62 = vld [vmem:[#allocation2] sm:$0x3]
    %v63 = vadd.f32 %v62, %v61
    %64 = vst [vmem:[#allocation2] sm:$0x3] %v63
    // Predicated region
    $region14: #{tpu_custom_call.1} parent=1 // pred_check
      %p65 = pneg %p26
    $region15: #{tpu_custom_call.1} parent=1 // pred_check_branch
      %67 = sbr.rel (%p65) target = $region17
    $region16: #{tpu_custom_call.1} parent=1 // pred_region
      %v68 = vld [vmem:[#allocation2] sm:$0x3]
      %vm69 = vcmask 1041408
      %v70 = vsel %vm69, %v68, 0.0
      %71 = vadd.xlane.f32.xlu0 %v70
      %v72 = vpop.xlane.xlu0 %71
      %vm73 = vcmask 1024
      %74 = vst.msk [vmem:[%s1] sm:$0x3] %vm73, %v72
    $region17: #{tpu_custom_call.1} parent=1 // pred_fallthru
      _
    // Predicated region
    $region18: #{tpu_custom_call.1} parent=1 // pred_check
      _
    $region19: #{tpu_custom_call.1} parent=1 // pred_check_branch
      %76 = sbr.rel (0) target = $region21
    $region20: #{tpu_custom_call.1} parent=1 // pred_region
      _
    $region21: #{tpu_custom_call.1} parent=1 // pred_fallthru
      _
    // Predicated region
    $region22: #{tpu_custom_call.1} parent=1 // pred_check
      _
    $region23: #{tpu_custom_call.1} parent=1 // pred_check_branch
      %78 = sbr.rel (0) target = $region25
    $region24: #{tpu_custom_call.1} parent=1 // pred_region
      _
    $region25: #{tpu_custom_call.1} parent=1 // pred_fallthru
      _
    %79 = vsyncpa [#allocation4], 1

</llo_original>
